<compile_context>
chip_gen: v5e
topology: v5e:2x2
jax: 0.10.0
libtpu: 0.0.40
codegen_flags: <defaults>
</compile_context>

<pallas_src>
import jax
import jax.numpy as jnp
from jax.experimental import pallas as pl
from jax.experimental.pallas import tpu as pltpu


def rnn_kernel(tok_ref, emb_ref, wih_t_ref, whh_t_ref, o_ref):
    """One-shot embedding + vanilla-RNN forward, everything resident in VMEM.

    tok_ref:   (S*B, 1) int32 token ids, time-major rows (row = t*B + b)
    emb_ref:   (V, D)   f32 embedding table (row 0 zeroed = padding_idx)
    wih_t_ref: (D, H)   f32 = torch weight_ih_l0, pre-transposed in the wrapper
    whh_t_ref: (H, H)   f32 = torch weight_hh_l0, pre-transposed in the wrapper
    o_ref:     (B, S*H) f32 lane-dense output; columns [t*H:(t+1)*H] hold h_t
    """
    SB = tok_ref.shape[0]
    V = emb_ref.shape[0]
    H = whh_t_ref.shape[0]
    B = o_ref.shape[0]
    S = SB // B

    # Token-independent projection of the whole embedding table (MXU); issued first
    # so it overlaps with the one-hot build on the VPU (different VLIW slots).
    emb_proj = jnp.dot(emb_ref[...], wih_t_ref[...],
                       preferred_element_type=jnp.float32)            # (V, H)

    # Embedding "gather" folded into a one-hot matmul on the MXU.
    # Out-of-range ids (<0 or >=V) select an all-zero row (like the padding row).
    tok = tok_ref[...]                                                 # (S*B, 1)
    onehot = (tok == jax.lax.broadcasted_iota(jnp.int32, (SB, V), 1))
    onehot = onehot.astype(jnp.float32)                                # (S*B, V)
    x_proj = jnp.dot(onehot, emb_proj,
                     preferred_element_type=jnp.float32)               # (S*B, H)

    whh_t = whh_t_ref[...]                                             # (H, H), loaded once

    # Recurrence: per step only h @ W_hh^T + add + tanh (fully unrolled; this serial
    # h-dependency chain is the only latency-critical region of the kernel).
    h = jnp.zeros((B, H), dtype=jnp.float32)
    hs = []
    for t in range(S):
        pre = x_proj[t * B:(t + 1) * B, :] + jnp.dot(
            h, whh_t, preferred_element_type=jnp.float32)
        h = jnp.tanh(pre)
        hs.append(h)

    # Single unmasked lane-dense store of the whole (B, S*H) slab; no per-step masked
    # 32-lane vst.msk stores remain on the critical path.
    o_ref[...] = jnp.concatenate(hs, axis=1).astype(o_ref.dtype)


def torch_model_forward(x_tokens, emb_table, w_ih, w_hh):
    """Equivalent of TorchModel.forward(x) with y=None.

    x_tokens:  (B, S) int32 token ids
    emb_table: (V, D) f32 embedding table (row 0 = padding row, zeroed)
    w_ih:      (H, D) f32 torch weight_ih_l0
    w_hh:      (H, H) f32 torch weight_hh_l0
    returns y_pred: (B, S, H) f32 (batch_first, like torch)
    """
    B, S = x_tokens.shape
    H = w_ih.shape[0]

    # Only glue outside the kernel: a tiny transpose/reshape of the int32 token ids
    # (time-major flattening), the free (32x32) weight transposes, and a contiguous
    # reshape of the lane-dense output slab back to (B, S, H).
    tok_col = x_tokens.T.reshape(S * B, 1).astype(jnp.int32)

    vmem = pl.BlockSpec(memory_space=pltpu.MemorySpace.VMEM)
    y_flat = pl.pallas_call(
        rnn_kernel,
        out_shape=jax.ShapeDtypeStruct((B, S * H), jnp.float32),
        in_specs=[vmem, vmem, vmem, vmem],
        out_specs=vmem,
    )(tok_col, emb_table, w_ih.T, w_hh.T)
    return y_flat.reshape(B, S, H)


def _reference_forward(x_tokens, emb_table, w_ih, w_hh):
    """Pure-JAX reference of nn.Embedding(padding_idx=0) + nn.RNN(batch_first, bias=False, tanh)."""
    x_emb = jnp.take(emb_table, x_tokens, axis=0)          # (B, S, D)
    B = x_emb.shape[0]
    H = w_ih.shape[0]

    def step(h, x_t):
        h_new = jnp.tanh(x_t @ w_ih.T + h @ w_hh.T)
        return h_new, h_new

    h0 = jnp.zeros((B, H), jnp.float32)
    _, ys = jax.lax.scan(step, h0, jnp.transpose(x_emb, (1, 0, 2)))
    return jnp.transpose(ys, (1, 0, 2))


if __name__ == "__main__":
    # Small shapes consistent with the module's constructor:
    # vector_dim=32, sentence_length=8, len(vocab)=30, hidden_size=32, batch=2.
    V, D, S, H, B = 30, 32, 8, 32, 2

    key = jax.random.PRNGKey(0)
    k_emb, k_ih, k_hh, k_tok = jax.random.split(key, 4)

    # nn.Embedding init: N(0,1); padding_idx=0 -> zero row 0.
    emb_table = jax.random.normal(k_emb, (V, D), dtype=jnp.float32)
    emb_table = emb_table.at[0].set(0.0)

    # nn.RNN weight init: U(-1/sqrt(H), 1/sqrt(H)); bias=False.
    bound = 1.0 / jnp.sqrt(jnp.float32(H))
    w_ih = jax.random.uniform(k_ih, (H, D), jnp.float32, -bound, bound)
    w_hh = jax.random.uniform(k_hh, (H, H), jnp.float32, -bound, bound)

    x_tokens = jax.random.randint(k_tok, (B, S), 0, V, dtype=jnp.int32)

    y_pred = torch_model_forward(x_tokens, emb_table, w_ih, w_hh)
    y_pred = jax.block_until_ready(y_pred)

    y_ref = _reference_forward(x_tokens, emb_table, w_ih, w_hh)
    assert y_pred.shape == (B, S, H)
    # Tolerance leaves margin for the (emb @ W_ih^T) reassociation vs. the reference's
    # gather-then-project ordering under the TPU's default matmul precision.
    assert jnp.allclose(y_pred, y_ref, atol=1e-4, rtol=1e-4)

    print("KERNEL_OK")
</pallas_src>

<mosaic_0001>
module attributes {stable_mosaic.version = 11 : i64} {
  func.func @rnn_kernel(%arg0: memref<16x1xi32, #tpu.memory_space<vmem>>, %arg1: memref<30x32xf32, #tpu.memory_space<vmem>>, %arg2: memref<32x32xf32, #tpu.memory_space<vmem>>, %arg3: memref<32x32xf32, #tpu.memory_space<vmem>>, %arg4: memref<2x256xf32, #tpu.memory_space<vmem>>) attributes {dimension_semantics = [], scalar_prefetch = 0 : i64, scratch_operands = 0 : i64, tpu.core_type = #tpu.core_type<tc>} {
    %c0 = arith.constant 0 : index
    %c0_0 = arith.constant 0 : index
    %0 = vector.load %arg1[%c0, %c0_0] : memref<30x32xf32, #tpu.memory_space<vmem>>, vector<30x32xf32>
    %c0_1 = arith.constant 0 : index
    %c0_2 = arith.constant 0 : index
    %1 = vector.load %arg2[%c0_1, %c0_2] : memref<32x32xf32, #tpu.memory_space<vmem>>, vector<32x32xf32>
    %cst = arith.constant dense<0.000000e+00> : vector<30x32xf32>
    %2 = tpu.matmul %0, %1, %cst {dimension_numbers = #tpu.dot_dimension_numbers<[1], [0], [0], [1], [0, 0, 1, 1], [], []>} : vector<30x32xf32>, vector<32x32xf32>, vector<30x32xf32> -> vector<30x32xf32>
    %c0_3 = arith.constant 0 : index
    %c0_4 = arith.constant 0 : index
    %3 = vector.load %arg0[%c0_3, %c0_4] : memref<16x1xi32, #tpu.memory_space<vmem>>, vector<16x1xi32>
    %4 = tpu.iota {dimensions = array<i32: 1>} : vector<16x30xi32>
    %5 = vector.broadcast %3 : vector<16x1xi32> to vector<16x30xi32>
    %6 = arith.cmpi eq, %5, %4 : vector<16x30xi32>
    %7 = arith.extui %6 : vector<16x30xi1> to vector<16x30xi32>
    %8 = arith.sitofp %7 : vector<16x30xi32> to vector<16x30xf32>
    %cst_5 = arith.constant dense<0.000000e+00> : vector<16x32xf32>
    %9 = tpu.matmul %8, %2, %cst_5 {dimension_numbers = #tpu.dot_dimension_numbers<[1], [0], [0], [1], [0, 0, 1, 1], [], []>} : vector<16x30xf32>, vector<30x32xf32>, vector<16x32xf32> -> vector<16x32xf32>
    %c0_6 = arith.constant 0 : index
    %c0_7 = arith.constant 0 : index
    %10 = vector.load %arg3[%c0_6, %c0_7] : memref<32x32xf32, #tpu.memory_space<vmem>>, vector<32x32xf32>
    %cst_8 = arith.constant 0.000000e+00 : f32
    %11 = vector.broadcast %cst_8 : f32 to vector<2x32xf32>
    %12 = vector.extract_strided_slice %9 {offsets = [0, 0], sizes = [2, 32], strides = [1, 1]} : vector<16x32xf32> to vector<2x32xf32>
    %cst_9 = arith.constant dense<0.000000e+00> : vector<2x32xf32>
    %13 = tpu.matmul %11, %10, %cst_9 {dimension_numbers = #tpu.dot_dimension_numbers<[1], [0], [0], [1], [0, 0, 1, 1], [], []>} : vector<2x32xf32>, vector<32x32xf32>, vector<2x32xf32> -> vector<2x32xf32>
    %14 = arith.addf %12, %13 : vector<2x32xf32>
    %15 = math.tanh %14 : vector<2x32xf32>
    %16 = vector.extract_strided_slice %9 {offsets = [2, 0], sizes = [2, 32], strides = [1, 1]} : vector<16x32xf32> to vector<2x32xf32>
    %cst_10 = arith.constant dense<0.000000e+00> : vector<2x32xf32>
    %17 = tpu.matmul %15, %10, %cst_10 {dimension_numbers = #tpu.dot_dimension_numbers<[1], [0], [0], [1], [0, 0, 1, 1], [], []>} : vector<2x32xf32>, vector<32x32xf32>, vector<2x32xf32> -> vector<2x32xf32>
    %18 = arith.addf %16, %17 : vector<2x32xf32>
    %19 = math.tanh %18 : vector<2x32xf32>
    %20 = vector.extract_strided_slice %9 {offsets = [4, 0], sizes = [2, 32], strides = [1, 1]} : vector<16x32xf32> to vector<2x32xf32>
    %cst_11 = arith.constant dense<0.000000e+00> : vector<2x32xf32>
    %21 = tpu.matmul %19, %10, %cst_11 {dimension_numbers = #tpu.dot_dimension_numbers<[1], [0], [0], [1], [0, 0, 1, 1], [], []>} : vector<2x32xf32>, vector<32x32xf32>, vector<2x32xf32> -> vector<2x32xf32>
    %22 = arith.addf %20, %21 : vector<2x32xf32>
    %23 = math.tanh %22 : vector<2x32xf32>
    %24 = vector.extract_strided_slice %9 {offsets = [6, 0], sizes = [2, 32], strides = [1, 1]} : vector<16x32xf32> to vector<2x32xf32>
    %cst_12 = arith.constant dense<0.000000e+00> : vector<2x32xf32>
    %25 = tpu.matmul %23, %10, %cst_12 {dimension_numbers = #tpu.dot_dimension_numbers<[1], [0], [0], [1], [0, 0, 1, 1], [], []>} : vector<2x32xf32>, vector<32x32xf32>, vector<2x32xf32> -> vector<2x32xf32>
    %26 = arith.addf %24, %25 : vector<2x32xf32>
    %27 = math.tanh %26 : vector<2x32xf32>
    %28 = vector.extract_strided_slice %9 {offsets = [8, 0], sizes = [2, 32], strides = [1, 1]} : vector<16x32xf32> to vector<2x32xf32>
    %cst_13 = arith.constant dense<0.000000e+00> : vector<2x32xf32>
    %29 = tpu.matmul %27, %10, %cst_13 {dimension_numbers = #tpu.dot_dimension_numbers<[1], [0], [0], [1], [0, 0, 1, 1], [], []>} : vector<2x32xf32>, vector<32x32xf32>, vector<2x32xf32> -> vector<2x32xf32>
    %30 = arith.addf %28, %29 : vector<2x32xf32>
    %31 = math.tanh %30 : vector<2x32xf32>
    %32 = vector.extract_strided_slice %9 {offsets = [10, 0], sizes = [2, 32], strides = [1, 1]} : vector<16x32xf32> to vector<2x32xf32>
    %cst_14 = arith.constant dense<0.000000e+00> : vector<2x32xf32>
    %33 = tpu.matmul %31, %10, %cst_14 {dimension_numbers = #tpu.dot_dimension_numbers<[1], [0], [0], [1], [0, 0, 1, 1], [], []>} : vector<2x32xf32>, vector<32x32xf32>, vector<2x32xf32> -> vector<2x32xf32>
    %34 = arith.addf %32, %33 : vector<2x32xf32>
    %35 = math.tanh %34 : vector<2x32xf32>
    %36 = vector.extract_strided_slice %9 {offsets = [12, 0], sizes = [2, 32], strides = [1, 1]} : vector<16x32xf32> to vector<2x32xf32>
    %cst_15 = arith.constant dense<0.000000e+00> : vector<2x32xf32>
    %37 = tpu.matmul %35, %10, %cst_15 {dimension_numbers = #tpu.dot_dimension_numbers<[1], [0], [0], [1], [0, 0, 1, 1], [], []>} : vector<2x32xf32>, vector<32x32xf32>, vector<2x32xf32> -> vector<2x32xf32>
    %38 = arith.addf %36, %37 : vector<2x32xf32>
    %39 = math.tanh %38 : vector<2x32xf32>
    %40 = vector.extract_strided_slice %9 {offsets = [14, 0], sizes = [2, 32], strides = [1, 1]} : vector<16x32xf32> to vector<2x32xf32>
    %cst_16 = arith.constant dense<0.000000e+00> : vector<2x32xf32>
    %41 = tpu.matmul %39, %10, %cst_16 {dimension_numbers = #tpu.dot_dimension_numbers<[1], [0], [0], [1], [0, 0, 1, 1], [], []>} : vector<2x32xf32>, vector<32x32xf32>, vector<2x32xf32> -> vector<2x32xf32>
    %42 = arith.addf %40, %41 : vector<2x32xf32>
    %43 = math.tanh %42 : vector<2x32xf32>
    %44 = tpu.concatenate %15, %19, %23, %27, %31, %35, %39, %43 in 1 : vector<2x32xf32>, vector<2x32xf32>, vector<2x32xf32>, vector<2x32xf32>, vector<2x32xf32>, vector<2x32xf32>, vector<2x32xf32>, vector<2x32xf32> -> vector<2x256xf32>
    %c0_17 = arith.constant 0 : index
    %c0_18 = arith.constant 0 : index
    %45 = vector.load %arg4[%c0_17, %c0_18] : memref<2x256xf32, #tpu.memory_space<vmem>>, vector<2x256xf32>
    tpu.vector_store %arg4[%c0_17, %c0_18], %44 {strides = array<i32>} : memref<2x256xf32, #tpu.memory_space<vmem>>, vector<2x256xf32>,
    return
  }
}

</mosaic_0001>

<llo_original>
// kernel: tpu_custom_call.1
$region0: #{tpu_custom_call.1}
  #allocation0 [shape = 'u32[]', space=smem, size = 0x4, offset = 0x4, fixed_abs, tag = 'smem constant byte address 0x4 - core index']
  #allocation1 [shape = 'u32[72,128]{1,0:T(1,128)}', space=vmem, size = 0x9000, scoped, tag = 'internal scratch']
  %s0 = inlined_call_operand.vmem [shape: s32[16,1], index: 0, kind: input, shape index: {}]
  %s1 = inlined_call_operand.hbm [shape: f32[30,32], index: 1, kind: input, shape index: {}]
  %s2 = inlined_call_operand.hbm [shape: f32[32,32], index: 2, kind: input, shape index: {}]
  %s3 = inlined_call_operand.hbm [shape: f32[32,32], index: 3, kind: input, shape index: {}]
  %s4 = inlined_call_operand.hbm [shape: f32[2,256], index: 4, kind: output, shape index: {}]
  %s5 = sld [smem:[#allocation0]]
  $region38: #{tpu_custom_call.1} parent=0
    _
  %s7 = ssub.s32 1, %s5
  %s8 = scalar_select 0, %s7, %s5
  $region1: #{tpu_custom_call.1} parent=0
    #allocation2 [shape = 'u8[16384]{0}', space=vmem, size = 0x4000, scoped, tag = 'input window, operand 1, single buffered']
    #allocation3 [shape = 's32[1]{0}', space=sflag, size = 0x4, scoped, tag = 'scoped memory for tpu_custom_call.1']
    #allocation4 [shape = 's32[1]{0}', space=sflag, size = 0x4, scoped, tag = 'scoped memory for tpu_custom_call.1']
    #allocation5 [shape = 'u8[16384]{0}', space=vmem, size = 0x4000, scoped, tag = 'input window, operand 2, single buffered']
    #allocation6 [shape = 's32[1]{0}', space=sflag, size = 0x4, scoped, tag = 'scoped memory for tpu_custom_call.1']
    #allocation7 [shape = 'u8[16384]{0}', space=vmem, size = 0x4000, scoped, tag = 'input window, operand 3, single buffered']
    #allocation8 [shape = 'u8[2048]{0}', space=vmem, size = 0x800, scoped, tag = 'output window, operand 0, single buffered']
    %9 = vsyncpa [#allocation3], 0
    %10 = vsyncpa [#allocation6], 0
    %11 = vsyncpa [#allocation4], 0
    // Predicated region
    $region2: #{tpu_custom_call.1} parent=1 // pred_check
      _
    $region3: #{tpu_custom_call.1} parent=1 // pred_check_branch
      %13 = sbr.rel (0) target = $region5
    $region4: #{tpu_custom_call.1} parent=1 // pred_region
      _
    $region5: #{tpu_custom_call.1} parent=1 // pred_fallthru
      _
    // Predicated region
    $region6: #{tpu_custom_call.1} parent=1 // pred_check
      _
    $region7: #{tpu_custom_call.1} parent=1 // pred_check_branch
      %15 = sbr.rel (0) target = $region9
    $region8: #{tpu_custom_call.1} parent=1 // pred_region
      %17 = vsyncadd [#allocation3], 0
      %s18 = sshll.u32 %s1, 4
      %s19 = int_to_ptr.hbm [resolvable:$true] %s18
      %s20 = sshll.u32 [#allocation2], 4
      %s21 = int_to_ptr.vmem [resolvable:$true] %s20
      %26 = dma.hbm_to_vmem [thread:$0]  %s19, 512, %s21, [#allocation3], 128, 128, 8
    $region9: #{tpu_custom_call.1} parent=1 // pred_fallthru
      _
    // Predicated region
    $region10: #{tpu_custom_call.1} parent=1 // pred_check
      _
    $region11: #{tpu_custom_call.1} parent=1 // pred_check_branch
      %28 = sbr.rel (0) target = $region13
    $region12: #{tpu_custom_call.1} parent=1 // pred_region
      %30 = vsyncadd [#allocation6], 0
      %s31 = sshll.u32 %s2, 4
      %s32 = int_to_ptr.hbm [resolvable:$true] %s31
      %s33 = sshll.u32 [#allocation5], 4
      %s34 = int_to_ptr.vmem [resolvable:$true] %s33
      %39 = dma.hbm_to_vmem [thread:$0]  %s32, 512, %s34, [#allocation6], 128, 128, 8
    $region13: #{tpu_custom_call.1} parent=1 // pred_fallthru
      _
    // Predicated region
    $region14: #{tpu_custom_call.1} parent=1 // pred_check
      _
    $region15: #{tpu_custom_call.1} parent=1 // pred_check_branch
      %41 = sbr.rel (0) target = $region17
    $region16: #{tpu_custom_call.1} parent=1 // pred_region
      %43 = vsyncadd [#allocation6], 0
      %s44 = sshll.u32 %s3, 4
      %s45 = int_to_ptr.hbm [resolvable:$true] %s44
      %s46 = sshll.u32 [#allocation7], 4
      %s47 = int_to_ptr.vmem [resolvable:$true] %s46
      %52 = dma.hbm_to_vmem [thread:$0]  %s45, 512, %s47, [#allocation6], 128, 128, 8
    $region17: #{tpu_custom_call.1} parent=1 // pred_fallthru
      _
    // Predicated region
    $region18: #{tpu_custom_call.1} parent=1 // pred_check
      _
    $region19: #{tpu_custom_call.1} parent=1 // pred_check_branch
      %54 = sbr.rel (0) target = $region21
    $region20: #{tpu_custom_call.1} parent=1 // pred_region
      %56 = dma.done [#allocation3], 512
    $region21: #{tpu_custom_call.1} parent=1 // pred_fallthru
      _
    // Predicated region
    $region22: #{tpu_custom_call.1} parent=1 // pred_check
      _
    $region23: #{tpu_custom_call.1} parent=1 // pred_check_branch
      %58 = sbr.rel (0) target = $region25
    $region24: #{tpu_custom_call.1} parent=1 // pred_region
      %60 = dma.done [#allocation6], 512
    $region25: #{tpu_custom_call.1} parent=1 // pred_fallthru
      _
    // Predicated region
    $region26: #{tpu_custom_call.1} parent=1 // pred_check
      _
    $region27: #{tpu_custom_call.1} parent=1 // pred_check_branch
      %62 = sbr.rel (0) target = $region29
    $region28: #{tpu_custom_call.1} parent=1 // pred_region
      %64 = dma.done [#allocation6], 512
    $region29: #{tpu_custom_call.1} parent=1 // pred_fallthru
      _
    %v65 = vld [vmem:[#allocation2] sm:$0xff]
    %v66 = vld [vmem:[#allocation2 + $0x8] sm:$0xff]
    %v67 = vld [vmem:[#allocation2 + $0x10] sm:$0xff]
    %v68 = vld [vmem:[#allocation2 + $0x18] sm:$0x3f]
    %v69 = vld [vmem:[#allocation5] sm:$0xff]
    %v70 = vld [vmem:[#allocation5 + $0x8] sm:$0xff]
    %v71 = vld [vmem:[#allocation5 + $0x10] sm:$0xff]
    %v72 = vld [vmem:[#allocation5 + $0x18] sm:$0xff]
    %vm73 = vcmask 261120
    %v75 = vsel %vm73, %v65, 0
    %v78 = vsel %vm73, %v66, 0
    %v81 = vsel %vm73, %v67, 0
    %v84 = vsel %vm73, %v68, 0
    %86 = vmatpush.msra.mxu0 0.0
    %87 = vmatpush.msra.mxu0 0.0
    %88 = vmatpush.msra.mxu0 0.0
    %89 = vmatpush.msra.mxu0 0.0
    %90 = vmatpush.msra.mxu0 0.0
    %91 = vmatpush.msra.mxu0 0.0
    %92 = vmatpush.msra.mxu0 0.0
    %93 = vmatpush.msra.mxu0 0.0
    %94 = vmatpush.msra.mxu0 0.0
    %95 = vmatpush.msra.mxu0 0.0
    %96 = vmatpush.msra.mxu0 0.0
    %97 = vmatpush.msra.mxu0 0.0
    %98 = vmatpush.msra.mxu0 %v72
    %99 = vmatpush.msra.mxu0 %v71
    %100 = vmatpush.msra.mxu0 %v70
    %101 = vmatpush.msra.mxu0 %v69
    %102 = vmatmul.f32.gmra.mxu0 %v75
    %v103 = vpop.f32.mrf.mxu0
    %v104 = vadd.f32 0.0, %v103
    %105 = vmatmul.f32.gmra.mxu0 %v78
    %v106 = vpop.f32.mrf.mxu0
    %v107 = vadd.f32 0.0, %v106
    %108 = vmatmul.f32.gmra.mxu0 %v81
    %v109 = vpop.f32.mrf.mxu0
    %v110 = vadd.f32 0.0, %v109
    %111 = vmatmul.f32.gmra.mxu0 %v84
    %v112 = vpop.f32.mrf.mxu0
    %v113 = vadd.f32 0.0, %v112
    %114 = vdwg.mxu0
    %v115 = vld [vmem:[%s0] sm:$0xff]
    %v116 = vld [vmem:[%s0 + $0x8] sm:$0xff]
    %v117 = vlaneseq
    %v118 = vand.u32 %v117, 127
    %119 = vset.pattern.permute.xlu0 0
    %120 = vperm.xlu0 %119, %v115
    %v121 = vpop.permute.xlu0 %120
    %122 = vset.pattern.permute.xlu0 0
    %123 = vperm.xlu0 %122, %v116
    %v124 = vpop.permute.xlu0 %123
    %vm125 = vcmp.eq.s32.totalorder %v121, %v118
    %vm126 = vcmp.eq.s32.totalorder %v124, %v118
    %v127 = vsel %vm125, 1, 0
    %v128 = vsel %vm126, 1, 0
    %v129 = vcvt.s32.f32 %v127
    %v130 = vcvt.s32.f32 %v128
    %vm131 = vcmask 244736
    %v133 = vsel %vm131, %v129, 0
    %v136 = vsel %vm131, %v130, 0
    %vm138 = vcmask 1045504
    %v140 = vsel %vm138, %v113, 0
    %142 = vmatpush.msra.mxu0 0.0
    %143 = vmatpush.msra.mxu0 0.0
    %144 = vmatpush.msra.mxu0 0.0
    %145 = vmatpush.msra.mxu0 0.0
    %146 = vmatpush.msra.mxu0 0.0
    %147 = vmatpush.msra.mxu0 0.0
    %148 = vmatpush.msra.mxu0 0.0
    %149 = vmatpush.msra.mxu0 0.0
    %150 = vmatpush.msra.mxu0 0.0
    %151 = vmatpush.msra.mxu0 0.0
    %152 = vmatpush.msra.mxu0 0.0
    %153 = vmatpush.msra.mxu0 0.0
    %154 = vmatpush.msra.mxu0 %v140
    %155 = vmatpush.msra.mxu0 %v110
    %156 = vmatpush.msra.mxu0 %v107
    %157 = vmatpush.msra.mxu0 %v104
    %158 = vmatmul.f32.gmra.mxu0 %v133
    %v159 = vpop.f32.mrf.mxu0
    %v160 = vadd.f32 0.0, %v159
    %161 = vmatmul.f32.gmra.mxu0 %v136
    %v162 = vpop.f32.mrf.mxu0
    %v163 = vadd.f32 0.0, %v162
    %164 = vdwg.mxu0
    %v165 = vld [vmem:[#allocation7] sm:$0xff]
    %v166 = vld [vmem:[#allocation7 + $0x8] sm:$0xff]
    %v167 = vld [vmem:[#allocation7 + $0x10] sm:$0xff]
    %v168 = vld [vmem:[#allocation7 + $0x18] sm:$0xff]
    %v170 = vsel %vm73, 0.0, 0
    %172 = vmatpush.msra.mxu0 0.0
    %173 = vmatpush.msra.mxu0 0.0
    %174 = vmatpush.msra.mxu0 0.0
    %175 = vmatpush.msra.mxu0 0.0
    %176 = vmatpush.msra.mxu0 0.0
    %177 = vmatpush.msra.mxu0 0.0
    %178 = vmatpush.msra.mxu0 0.0
    %179 = vmatpush.msra.mxu0 0.0
    %180 = vmatpush.msra.mxu0 0.0
    %181 = vmatpush.msra.mxu0 0.0
    %182 = vmatpush.msra.mxu0 0.0
    %183 = vmatpush.msra.mxu0 0.0
    %184 = vmatpush.msra.mxu0 %v168
    %185 = vmatpush.msra.mxu0 %v167
    %186 = vmatpush.msra.mxu0 %v166
    %187 = vmatpush.msra.mxu0 %v165
    %188 = vmatmul.f32.gmra.mxu0 %v170
    %v189 = vpop.f32.mrf.mxu0
    %v190 = vadd.f32 0.0, %v189
    %191 = vdwg.mxu0
    %v192 = vadd.f32 %v160, %v190
    %v193 = vtanh.pop %v192
    %v195 = vsel %vm73, %v193, 0
    %197 = vmatpush.msra.mxu0 0.0
    %198 = vmatpush.msra.mxu0 0.0
    %199 = vmatpush.msra.mxu0 0.0
    %200 = vmatpush.msra.mxu0 0.0
    %201 = vmatpush.msra.mxu0 0.0
    %202 = vmatpush.msra.mxu0 0.0
    %203 = vmatpush.msra.mxu0 0.0
    %204 = vmatpush.msra.mxu0 0.0
    %205 = vmatpush.msra.mxu0 0.0
    %206 = vmatpush.msra.mxu0 0.0
    %207 = vmatpush.msra.mxu0 0.0
    %208 = vmatpush.msra.mxu0 0.0
    %209 = vmatpush.msra.mxu0 %v168
    %210 = vmatpush.msra.mxu0 %v167
    %211 = vmatpush.msra.mxu0 %v166
    %212 = vmatpush.msra.mxu0 %v165
    %213 = vmatmul.f32.gmra.mxu0 %v195
    %v214 = vpop.f32.mrf.mxu0
    %v215 = vadd.f32 0.0, %v214
    %216 = vdwg.mxu0
    %v218 = vrot.slane %v215, 6
    %v220 = vadd.f32 %v160, %v218
    %v221 = vtanh.pop %v220
    %v223 = vrot.slane %v221, 2
    %v224 = vsel %vm73, %v223, 0
    %226 = vmatpush.msra.mxu0 0.0
    %227 = vmatpush.msra.mxu0 0.0
    %228 = vmatpush.msra.mxu0 0.0
    %229 = vmatpush.msra.mxu0 0.0
    %230 = vmatpush.msra.mxu0 0.0
    %231 = vmatpush.msra.mxu0 0.0
    %232 = vmatpush.msra.mxu0 0.0
    %233 = vmatpush.msra.mxu0 0.0
    %234 = vmatpush.msra.mxu0 0.0
    %235 = vmatpush.msra.mxu0 0.0
    %236 = vmatpush.msra.mxu0 0.0
    %237 = vmatpush.msra.mxu0 0.0
    %238 = vmatpush.msra.mxu0 %v168
    %239 = vmatpush.msra.mxu0 %v167
    %240 = vmatpush.msra.mxu0 %v166
    %241 = vmatpush.msra.mxu0 %v165
    %242 = vmatmul.f32.gmra.mxu0 %v224
    %v243 = vpop.f32.mrf.mxu0
    %v244 = vadd.f32 0.0, %v243
    %245 = vdwg.mxu0
    %v247 = vrot.slane %v244, 4
    %v249 = vadd.f32 %v160, %v247
    %v250 = vtanh.pop %v249
    %v252 = vrot.slane %v250, 4
    %v253 = vsel %vm73, %v252, 0
    %255 = vmatpush.msra.mxu0 0.0
    %256 = vmatpush.msra.mxu0 0.0
    %257 = vmatpush.msra.mxu0 0.0
    %258 = vmatpush.msra.mxu0 0.0
    %259 = vmatpush.msra.mxu0 0.0
    %260 = vmatpush.msra.mxu0 0.0
    %261 = vmatpush.msra.mxu0 0.0
    %262 = vmatpush.msra.mxu0 0.0
    %263 = vmatpush.msra.mxu0 0.0
    %264 = vmatpush.msra.mxu0 0.0
    %265 = vmatpush.msra.mxu0 0.0
    %266 = vmatpush.msra.mxu0 0.0
    %267 = vmatpush.msra.mxu0 %v168
    %268 = vmatpush.msra.mxu0 %v167
    %269 = vmatpush.msra.mxu0 %v166
    %270 = vmatpush.msra.mxu0 %v165
    %271 = vmatmul.f32.gmra.mxu0 %v253
    %v272 = vpop.f32.mrf.mxu0
    %v273 = vadd.f32 0.0, %v272
    %274 = vdwg.mxu0
    %v276 = vrot.slane %v273, 2
    %v278 = vadd.f32 %v160, %v276
    %v279 = vtanh.pop %v278
    %v281 = vrot.slane %v279, 6
    %v282 = vsel %vm73, %v281, 0
    %284 = vmatpush.msra.mxu0 0.0
    %285 = vmatpush.msra.mxu0 0.0
    %286 = vmatpush.msra.mxu0 0.0
    %287 = vmatpush.msra.mxu0 0.0
    %288 = vmatpush.msra.mxu0 0.0
    %289 = vmatpush.msra.mxu0 0.0
    %290 = vmatpush.msra.mxu0 0.0
    %291 = vmatpush.msra.mxu0 0.0
    %292 = vmatpush.msra.mxu0 0.0
    %293 = vmatpush.msra.mxu0 0.0
    %294 = vmatpush.msra.mxu0 0.0
    %295 = vmatpush.msra.mxu0 0.0
    %296 = vmatpush.msra.mxu0 %v168
    %297 = vmatpush.msra.mxu0 %v167
    %298 = vmatpush.msra.mxu0 %v166
    %299 = vmatpush.msra.mxu0 %v165
    %300 = vmatmul.f32.gmra.mxu0 %v282
    %v301 = vpop.f32.mrf.mxu0
    %v302 = vadd.f32 0.0, %v301
    %303 = vdwg.mxu0
    %v304 = vadd.f32 %v163, %v302
    %v305 = vtanh.pop %v304
    %v307 = vsel %vm73, %v305, 0
    %309 = vmatpush.msra.mxu0 0.0
    %310 = vmatpush.msra.mxu0 0.0
    %311 = vmatpush.msra.mxu0 0.0
    %312 = vmatpush.msra.mxu0 0.0
    %313 = vmatpush.msra.mxu0 0.0
    %314 = vmatpush.msra.mxu0 0.0
    %315 = vmatpush.msra.mxu0 0.0
    %316 = vmatpush.msra.mxu0 0.0
    %317 = vmatpush.msra.mxu0 0.0
    %318 = vmatpush.msra.mxu0 0.0
    %319 = vmatpush.msra.mxu0 0.0
    %320 = vmatpush.msra.mxu0 0.0
    %321 = vmatpush.msra.mxu0 %v168
    %322 = vmatpush.msra.mxu0 %v167
    %323 = vmatpush.msra.mxu0 %v166
    %324 = vmatpush.msra.mxu0 %v165
    %325 = vmatmul.f32.gmra.mxu0 %v307
    %v326 = vpop.f32.mrf.mxu0
    %v327 = vadd.f32 0.0, %v326
    %328 = vdwg.mxu0
    %v330 = vrot.slane %v327, 6
    %v332 = vadd.f32 %v163, %v330
    %v333 = vtanh.pop %v332
    %v335 = vrot.slane %v333, 2
    %v336 = vsel %vm73, %v335, 0
    %338 = vmatpush.msra.mxu0 0.0
    %339 = vmatpush.msra.mxu0 0.0
    %340 = vmatpush.msra.mxu0 0.0
    %341 = vmatpush.msra.mxu0 0.0
    %342 = vmatpush.msra.mxu0 0.0
    %343 = vmatpush.msra.mxu0 0.0
    %344 = vmatpush.msra.mxu0 0.0
    %345 = vmatpush.msra.mxu0 0.0
    %346 = vmatpush.msra.mxu0 0.0
    %347 = vmatpush.msra.mxu0 0.0
    %348 = vmatpush.msra.mxu0 0.0
    %349 = vmatpush.msra.mxu0 0.0
    %350 = vmatpush.msra.mxu0 %v168
    %351 = vmatpush.msra.mxu0 %v167
    %352 = vmatpush.msra.mxu0 %v166
    %353 = vmatpush.msra.mxu0 %v165
    %354 = vmatmul.f32.gmra.mxu0 %v336
    %v355 = vpop.f32.mrf.mxu0
    %v356 = vadd.f32 0.0, %v355
    %357 = vdwg.mxu0
    %v359 = vrot.slane %v356, 4
    %v361 = vadd.f32 %v163, %v359
    %v362 = vtanh.pop %v361
    %v364 = vrot.slane %v362, 4
    %v365 = vsel %vm73, %v364, 0
    %367 = vmatpush.msra.mxu0 0.0
    %368 = vmatpush.msra.mxu0 0.0
    %369 = vmatpush.msra.mxu0 0.0
    %370 = vmatpush.msra.mxu0 0.0
    %371 = vmatpush.msra.mxu0 0.0
    %372 = vmatpush.msra.mxu0 0.0
    %373 = vmatpush.msra.mxu0 0.0
    %374 = vmatpush.msra.mxu0 0.0
    %375 = vmatpush.msra.mxu0 0.0
    %376 = vmatpush.msra.mxu0 0.0
    %377 = vmatpush.msra.mxu0 0.0
    %378 = vmatpush.msra.mxu0 0.0
    %379 = vmatpush.msra.mxu0 %v168
    %380 = vmatpush.msra.mxu0 %v167
    %381 = vmatpush.msra.mxu0 %v166
    %382 = vmatpush.msra.mxu0 %v165
    %383 = vmatmul.f32.gmra.mxu0 %v365
    %v384 = vpop.f32.mrf.mxu0
    %v385 = vadd.f32 0.0, %v384
    %386 = vdwg.mxu0
    %v388 = vrot.slane %v385, 2
    %v390 = vadd.f32 %v163, %v388
    %v391 = vtanh.pop %v390
    %392 = vrot.lane.b32.xlu0 %v223, 32
    %v393 = vpop.permute.xlu0 %392
    %395 = vrot.lane.b32.xlu0 %v252, 64
    %v396 = vpop.permute.xlu0 %395
    %398 = vrot.lane.b32.xlu0 %v281, 96
    %v399 = vpop.permute.xlu0 %398
    %401 = vrot.lane.b32.xlu0 %v335, 32
    %v402 = vpop.permute.xlu0 %401
    %404 = vrot.lane.b32.xlu0 %v364, 64
    %v405 = vpop.permute.xlu0 %404
    %v408 = vrot.slane %v391, 6
    %409 = vrot.lane.b32.xlu0 %v408, 96
    %v410 = vpop.permute.xlu0 %409
    %v412 = vsel %vm73, %v193, %v393
    %vm413 = vcmask 523264
    %v414 = vsel %vm413, %v412, %v396
    %vm415 = vcmask 785408
    %v416 = vsel %vm415, %v414, %v399
    %v417 = vsel %vm73, %v305, %v402
    %v418 = vsel %vm413, %v417, %v405
    %v419 = vsel %vm415, %v418, %v410
    %v422 = vrot.slane %v419, 6
    %vm423 = vcmask 1041408
    %v424 = vsel %vm423, %v416, %v422
    %426 = vst [vmem:[#allocation8] sm:$0xf] %v424
    // Predicated region
    $region30: #{tpu_custom_call.1} parent=1 // pred_check
      _
    $region31: #{tpu_custom_call.1} parent=1 // pred_check_branch
      %428 = sbr.rel (0) target = $region33
    $region32: #{tpu_custom_call.1} parent=1 // pred_region
      %430 = vsyncadd [#allocation4], 0
      %s432 = sshll.u32 [#allocation8], 4
      %s433 = int_to_ptr.vmem [resolvable:$true] %s432
      %s434 = sshll.u32 %s4, 4
      %s435 = int_to_ptr.hbm [resolvable:$true] %s434
      %437 = dma.vmem_to_hbm [thread:$0]  %s433, 64, %s435, [#allocation4]
    $region33: #{tpu_custom_call.1} parent=1 // pred_fallthru
      _
    // Predicated region
    $region34: #{tpu_custom_call.1} parent=1 // pred_check
      _
    $region35: #{tpu_custom_call.1} parent=1 // pred_check_branch
      %439 = sbr.rel (0) target = $region37
    $region36: #{tpu_custom_call.1} parent=1 // pred_region
      %441 = dma.done [#allocation4], 64
    $region37: #{tpu_custom_call.1} parent=1 // pred_fallthru
      _
    %442 = vsyncpa [#allocation3], 1
    %443 = vsyncpa [#allocation6], 1
    %444 = vsyncpa [#allocation4], 1

</llo_original>
